<compile_context>
chip_gen: v6e
topology: v6e:2x2x1
jax: 0.10.0
libtpu: 0.0.40
codegen_flags: <defaults>
</compile_context>

<pallas_src>
import functools

import jax
import jax.numpy as jnp
from jax import lax
from jax.experimental import pallas as pl
from jax.experimental.pallas import tpu as pltpu

LANE = 128
CHUNK = 16                     # sublane rows per compute sub-chunk (2 f32 vregs/channel)
TARGET_BLOCK_BYTES = 4 << 20   # ~4 MiB DMA block per grid step
DB_BUDGET_BYTES = 16 << 20     # double-buffered input budget (fits v7x scoped VMEM)


def _genloss_kernel(x_ref, o_ref, acc_ref, *, eps, n_chan, s_tile, t_per,
                    num_tiles, n_split, hw, needs_mask, has_overflow):
    bs = pl.program_id(0)
    t = pl.program_id(1)
    split = (bs % n_split) if n_split > 1 else 0
    g_tile = split * t_per + t            # global spatial-tile index
    base_row = g_tile * s_tile            # global sublane-row offset of this tile

    @pl.when(t == 0)
    def _():
        acc_ref[...] = jnp.zeros_like(acc_ref)

    def load(c, off, rows):
        return x_ref[0, c, pl.ds(off, rows), :].astype(jnp.float32)

    def one_chunk(off, rows, masked):
        # Two passes over channels (running max, then exp/sum): slabs are
        # re-read from VMEM so vreg liveness stays bounded regardless of C.
        m = load(0, off, rows)
        for c in range(1, n_chan):
            m = jnp.maximum(m, load(c, off, rows))
        rest = jnp.exp(load(0, off, rows) - m)
        for c in range(1, n_chan - 1):
            rest = rest + jnp.exp(load(c, off, rows) - m)
        e_last = jnp.exp(load(n_chan - 1, off, rows) - m)
        denom = rest + e_last
        # -log(1 - p_last + eps) == log(denom) - log(rest + eps*denom)
        loss = jnp.log(denom) - jnp.log(rest + eps * denom)
        if masked:
            r = lax.broadcasted_iota(jnp.int32, (rows, LANE), 0)
            col = lax.broadcasted_iota(jnp.int32, (rows, LANE), 1)
            gidx = (base_row + off + r) * LANE + col
            loss = jnp.where(gidx < hw, loss, 0.0)   # select, not multiply
        idx = (pl.ds(0, rows), slice(None))
        acc_ref[idx] = acc_ref[idx] + loss

    n_full = s_tile // CHUNK
    tail = s_tile - n_full * CHUNK

    def accumulate(masked):
        if n_full > 0:
            def body(j, carry):
                off = pl.multiple_of(j * CHUNK, CHUNK)
                one_chunk(off, CHUNK, masked)
                return carry
            lax.fori_loop(0, n_full, body, 0, unroll=(4 if n_full >= 4 else 1))
        if tail > 0:
            one_chunk(n_full * CHUNK, tail, masked)

    def do_accumulate():
        if not needs_mask:
            accumulate(False)                 # no mask cost anywhere
        elif num_tiles == 1:
            accumulate(True)
        else:
            @pl.when(g_tile != num_tiles - 1)  # mask only on the last tile
            def _():
                accumulate(False)

            @pl.when(g_tile == num_tiles - 1)
            def _():
                accumulate(True)

    if has_overflow:
        # Uneven 2-core spatial split: skip the (clamped) overflow step.
        @pl.when(g_tile < num_tiles)
        def _():
            do_accumulate()
    else:
        do_accumulate()

    @pl.when(t == t_per - 1)
    def _():
        o_ref[...] = jnp.sum(acc_ref[...], axis=0, keepdims=True).reshape(1, 1, LANE)


def gen_loss(x, eps=1e-10):
    """x: [B, C, H, W] (NCHW), float32 or bfloat16. Returns scalar f32 loss."""
    B, C, H, W = x.shape
    assert C >= 2, "channel softmax with a 'last channel' needs C >= 2"
    HW = H * W
    itemsize = jnp.dtype(x.dtype).itemsize

    s_rows = pl.cdiv(HW, LANE)
    hw_pad = s_rows * LANE

    x3 = x.reshape(B, C, HW)
    if hw_pad != HW:
        # TODO(synk): rare path (HW % 128 != 0) still pays one HBM pad copy; a
        # 3-D (B, C, HW) BlockSpec with in-kernel reshape would remove it.
        x3 = jnp.pad(x3, ((0, 0), (0, 0), (0, hw_pad - HW)))
    x4 = x3.reshape(B, C, s_rows, LANE)

    # --- spatial tile: big DMA blocks (~4 MiB/step), VMEM-budgeted ------------
    bytes_per_row = C * LANE * itemsize
    rows_target = max(CHUNK, (TARGET_BLOCK_BYTES // bytes_per_row) // CHUNK * CHUNK)
    while rows_target > CHUNK and 2 * rows_target * bytes_per_row > DB_BUDGET_BYTES:
        rows_target = max(CHUNK, (rows_target // 2) // CHUNK * CHUNK)
    if B == 1 and s_rows > 2 * CHUNK:
        # single batch: force >= 2 spatial tiles so the tile axis can feed both
        # v7x TensorCores.
        rows_target = min(rows_target, max(CHUNK, (pl.cdiv(s_rows, 2) // CHUNK) * CHUNK))

    if s_rows <= rows_target:
        s_tile, num_tiles = s_rows, 1          # full dim -> always a legal block
    else:
        s_tile = rows_target                   # multiple of CHUNK (>= 8)
        num_tiles = pl.cdiv(s_rows, s_tile)

    needs_mask = (num_tiles * s_tile * LANE) != HW

    # --- 2-core split of the tile axis when the batch axis alone can't -------
    n_split = 2 if (B == 1 and num_tiles >= 2) else 1
    t_per = pl.cdiv(num_tiles, n_split)
    has_overflow = (t_per * n_split) != num_tiles

    block_bytes = s_tile * bytes_per_row
    vmem_limit = int(min(100 << 20, max(32 << 20, 2 * block_bytes + (4 << 20))))

    kernel = functools.partial(
        _genloss_kernel, eps=float(eps), n_chan=C, s_tile=s_tile, t_per=t_per,
        num_tiles=num_tiles, n_split=n_split, hw=HW, needs_mask=needs_mask,
        has_overflow=has_overflow)

    if n_split == 1:
        def in_idx(b, t):
            return (b, 0, t, 0)
    elif has_overflow:
        def in_idx(bs, t):
            g = (bs % n_split) * t_per + t
            return (bs // n_split, 0, jnp.minimum(g, num_tiles - 1), 0)
    else:
        def in_idx(bs, t):
            return (bs // n_split, 0, (bs % n_split) * t_per + t, 0)

    cost = pl.CostEstimate(
        flops=B * HW * (3 * C + 5),
        transcendentals=B * HW * (C + 2),
        bytes_accessed=B * C * hw_pad * itemsize + B * n_split * LANE * 4)

    partials = pl.pallas_call(
        kernel,
        out_shape=jax.ShapeDtypeStruct((B * n_split, 1, LANE), jnp.float32),
        grid_spec=pltpu.PrefetchScalarGridSpec(
            num_scalar_prefetch=0,
            grid=(B * n_split, t_per),
            in_specs=[pl.BlockSpec((1, C, s_tile, LANE), in_idx)],
            out_specs=pl.BlockSpec((1, 1, LANE), lambda bs, t: (bs, 0, 0)),
            scratch_shapes=[pltpu.VMEM((CHUNK, LANE), jnp.float32)],
        ),
        compiler_params=pltpu.CompilerParams(
            dimension_semantics=("parallel", "arbitrary"),
            vmem_limit_bytes=vmem_limit,
        ),
        cost_estimate=cost,
    )(x4)

    return jnp.sum(partials) / jnp.float32(B * HW)


def gen_loss_ref(x, eps=1e-10):
    p = jax.nn.softmax(x.astype(jnp.float32), axis=1)
    l = -jnp.log(1.0 - p[:, -1] + eps)
    return jnp.mean(l)


if __name__ == "__main__":
    key = jax.random.PRNGKey(0)
    B, C, H, W = 2, 4, 16, 16
    x = jax.random.normal(key, (B, C, H, W), dtype=jnp.float32)

    out = gen_loss(x)
    jax.block_until_ready(out)

    ref = gen_loss_ref(x)
    assert jnp.allclose(out, ref, rtol=1e-5, atol=1e-5), (out, ref)

    print("KERNEL_OK")
</pallas_src>

<mosaic_0001>
module attributes {stable_mosaic.version = 11 : i64} {
  func.func @_genloss_kernel(%arg0: i32, %arg1: i32, %arg2: memref<1x4x2x128xf32, #tpu.memory_space<vmem>>, %arg3: memref<1x1x128xf32, #tpu.memory_space<vmem>>, %arg4: memref<16x128xf32, #tpu.memory_space<vmem>>) attributes {dimension_semantics = [#tpu.dimension_semantics<parallel>, #tpu.dimension_semantics<arbitrary>], iteration_bounds = array<i64: 2, 1>, scalar_prefetch = 0 : i64, scratch_operands = 1 : i64, tpu.core_type = #tpu.core_type<tc>, window_params = [{transform_indices = @transform_0, window_bounds = array<i64: 1, 4, 2, 128>}, {transform_indices = @transform_1, window_bounds = array<i64: 1, 1, 128>}]} {
    %c0_i32 = arith.constant 0 : i32
    %0 = arith.cmpi eq, %arg1, %c0_i32 : i32
    %1 = arith.extui %0 : i1 to i32
    %c0_i32_0 = arith.constant 0 : i32
    %2 = arith.cmpi ne, %1, %c0_i32_0 : i32
    scf.if %2 {
      %cst_35 = arith.constant 0.000000e+00 : f32
      %45 = vector.broadcast %cst_35 : f32 to vector<16x128xf32>
      %c0_36 = arith.constant 0 : index
      %c0_37 = arith.constant 0 : index
      %46 = vector.load %arg4[%c0_36, %c0_37] : memref<16x128xf32, #tpu.memory_space<vmem>>, vector<16x128xf32>
      tpu.vector_store %arg4[%c0_36, %c0_37], %45 {strides = array<i32>} : memref<16x128xf32, #tpu.memory_space<vmem>>, vector<16x128xf32>,
    } else {
    }
    %c0 = arith.constant 0 : index
    %c0_1 = arith.constant 0 : index
    %c0_2 = arith.constant 0 : index
    %c0_3 = arith.constant 0 : index
    %3 = vector.load %arg2[%c0, %c0_1, %c0_2, %c0_3] : memref<1x4x2x128xf32, #tpu.memory_space<vmem>>, vector<1x1x2x128xf32>
    %4 = vector.shape_cast %3 : vector<1x1x2x128xf32> to vector<2x128xf32>
    %c0_4 = arith.constant 0 : index
    %c1 = arith.constant 1 : index
    %c0_5 = arith.constant 0 : index
    %c0_6 = arith.constant 0 : index
    %5 = vector.load %arg2[%c0_4, %c1, %c0_5, %c0_6] : memref<1x4x2x128xf32, #tpu.memory_space<vmem>>, vector<1x1x2x128xf32>
    %6 = vector.shape_cast %5 : vector<1x1x2x128xf32> to vector<2x128xf32>
    %7 = arith.maximumf %4, %6 : vector<2x128xf32>
    %c0_7 = arith.constant 0 : index
    %c2 = arith.constant 2 : index
    %c0_8 = arith.constant 0 : index
    %c0_9 = arith.constant 0 : index
    %8 = vector.load %arg2[%c0_7, %c2, %c0_8, %c0_9] : memref<1x4x2x128xf32, #tpu.memory_space<vmem>>, vector<1x1x2x128xf32>
    %9 = vector.shape_cast %8 : vector<1x1x2x128xf32> to vector<2x128xf32>
    %10 = arith.maximumf %7, %9 : vector<2x128xf32>
    %c0_10 = arith.constant 0 : index
    %c3 = arith.constant 3 : index
    %c0_11 = arith.constant 0 : index
    %c0_12 = arith.constant 0 : index
    %11 = vector.load %arg2[%c0_10, %c3, %c0_11, %c0_12] : memref<1x4x2x128xf32, #tpu.memory_space<vmem>>, vector<1x1x2x128xf32>
    %12 = vector.shape_cast %11 : vector<1x1x2x128xf32> to vector<2x128xf32>
    %13 = arith.maximumf %10, %12 : vector<2x128xf32>
    %c0_13 = arith.constant 0 : index
    %c0_14 = arith.constant 0 : index
    %c0_15 = arith.constant 0 : index
    %c0_16 = arith.constant 0 : index
    %14 = vector.load %arg2[%c0_13, %c0_14, %c0_15, %c0_16] : memref<1x4x2x128xf32, #tpu.memory_space<vmem>>, vector<1x1x2x128xf32>
    %15 = vector.shape_cast %14 : vector<1x1x2x128xf32> to vector<2x128xf32>
    %16 = arith.subf %15, %13 : vector<2x128xf32>
    %17 = math.exp %16 : vector<2x128xf32>
    %c0_17 = arith.constant 0 : index
    %c1_18 = arith.constant 1 : index
    %c0_19 = arith.constant 0 : index
    %c0_20 = arith.constant 0 : index
    %18 = vector.load %arg2[%c0_17, %c1_18, %c0_19, %c0_20] : memref<1x4x2x128xf32, #tpu.memory_space<vmem>>, vector<1x1x2x128xf32>
    %19 = vector.shape_cast %18 : vector<1x1x2x128xf32> to vector<2x128xf32>
    %20 = arith.subf %19, %13 : vector<2x128xf32>
    %21 = math.exp %20 : vector<2x128xf32>
    %22 = arith.addf %17, %21 : vector<2x128xf32>
    %c0_21 = arith.constant 0 : index
    %c2_22 = arith.constant 2 : index
    %c0_23 = arith.constant 0 : index
    %c0_24 = arith.constant 0 : index
    %23 = vector.load %arg2[%c0_21, %c2_22, %c0_23, %c0_24] : memref<1x4x2x128xf32, #tpu.memory_space<vmem>>, vector<1x1x2x128xf32>
    %24 = vector.shape_cast %23 : vector<1x1x2x128xf32> to vector<2x128xf32>
    %25 = arith.subf %24, %13 : vector<2x128xf32>
    %26 = math.exp %25 : vector<2x128xf32>
    %27 = arith.addf %22, %26 : vector<2x128xf32>
    %c0_25 = arith.constant 0 : index
    %c3_26 = arith.constant 3 : index
    %c0_27 = arith.constant 0 : index
    %c0_28 = arith.constant 0 : index
    %28 = vector.load %arg2[%c0_25, %c3_26, %c0_27, %c0_28] : memref<1x4x2x128xf32, #tpu.memory_space<vmem>>, vector<1x1x2x128xf32>
    %29 = vector.shape_cast %28 : vector<1x1x2x128xf32> to vector<2x128xf32>
    %30 = arith.subf %29, %13 : vector<2x128xf32>
    %31 = math.exp %30 : vector<2x128xf32>
    %32 = arith.addf %27, %31 : vector<2x128xf32>
    %33 = math.log %32 : vector<2x128xf32>
    %cst = arith.constant 1.000000e-10 : f32
    %34 = vector.broadcast %cst : f32 to vector<2x128xf32>
    %35 = arith.mulf %34, %32 : vector<2x128xf32>
    %36 = arith.addf %27, %35 : vector<2x128xf32>
    %37 = math.log %36 : vector<2x128xf32>
    %38 = arith.subf %33, %37 : vector<2x128xf32>
    %c0_29 = arith.constant 0 : index
    %c0_30 = arith.constant 0 : index
    %39 = vector.load %arg4[%c0_29, %c0_30] : memref<16x128xf32, #tpu.memory_space<vmem>>, vector<2x128xf32>
    %40 = arith.addf %39, %38 : vector<2x128xf32>
    %c0_31 = arith.constant 0 : index
    %c0_32 = arith.constant 0 : index
    %41 = vector.load %arg4[%c0_31, %c0_32] : memref<16x128xf32, #tpu.memory_space<vmem>>, vector<2x128xf32>
    tpu.vector_store %arg4[%c0_31, %c0_32], %40 {strides = array<i32>} : memref<16x128xf32, #tpu.memory_space<vmem>>, vector<2x128xf32>,
    %c0_i32_33 = arith.constant 0 : i32
    %42 = arith.cmpi eq, %arg1, %c0_i32_33 : i32
    %43 = arith.extui %42 : i1 to i32
    %c0_i32_34 = arith.constant 0 : i32
    %44 = arith.cmpi ne, %43, %c0_i32_34 : i32
    scf.if %44 {
      %c0_35 = arith.constant 0 : index
      %c0_36 = arith.constant 0 : index
      %45 = vector.load %arg4[%c0_35, %c0_36] : memref<16x128xf32, #tpu.memory_space<vmem>>, vector<16x128xf32>
      %cst_37 = arith.constant dense<0.000000e+00> : vector<128xf32>
      %46 = vector.multi_reduction <add>, %45, %cst_37 [0] : vector<16x128xf32> to vector<128xf32>
      %47 = vector.shape_cast %46 : vector<128xf32> to vector<1x128xf32>
      %48 = vector.shape_cast %47 : vector<1x128xf32> to vector<1x1x128xf32>
      %c0_38 = arith.constant 0 : index
      %c0_39 = arith.constant 0 : index
      %c0_40 = arith.constant 0 : index
      %49 = vector.load %arg3[%c0_38, %c0_39, %c0_40] : memref<1x1x128xf32, #tpu.memory_space<vmem>>, vector<1x1x128xf32>
      tpu.vector_store %arg3[%c0_38, %c0_39, %c0_40], %48 {strides = array<i32>} : memref<1x1x128xf32, #tpu.memory_space<vmem>>, vector<1x1x128xf32>,
    } else {
    }
    return
  }
  func.func @transform_0(%arg0: i32, %arg1: i32) -> (i32, i32, i32, i32) {
    %c0_i32 = arith.constant 0 : i32
    %c0_i32_0 = arith.constant 0 : i32
    %c0_i32_1 = arith.constant 0 : i32
    return %arg0, %c0_i32, %arg1, %c0_i32_0 : i32, i32, i32, i32
  }
  func.func @transform_1(%arg0: i32, %arg1: i32) -> (i32, i32, i32) {
    %c0_i32 = arith.constant 0 : i32
    %c0_i32_0 = arith.constant 0 : i32
    %c0_i32_1 = arith.constant 0 : i32
    return %arg0, %c0_i32, %c0_i32_0 : i32, i32, i32
  }
}

</mosaic_0001>

<llo_original>
// kernel: tpu_custom_call.1
$region0: #{tpu_custom_call.1}
  #allocation0 [shape = 'u32[]', space=smem, size = 0x4, offset = 0x4, fixed_abs, tag = 'smem constant byte address 0x4 - core index']
  #allocation1 [shape = 'u32[144,128]{1,0:T(1,128)}', space=vmem, size = 0x12000, scoped, tag = 'internal scratch']
  #allocation2 [shape = 'f32[16,128]{1,0:T(8,128)}', space=vmem, size = 0x2000, scoped, tag = 'scratch operand']
  %s0 = inlined_call_operand.hbm [shape: f32[2,4,2,128], index: 0, kind: input, shape index: {}]
  %s1 = inlined_call_operand.hbm [shape: f32[2,1,128], index: 1, kind: output, shape index: {}]
  %s2 = sld [smem:[#allocation0]]
  $region49: #{tpu_custom_call.1} parent=0
    _
  %s4 = ssub.s32 1, %s2
  %s5 = scalar_select 0, %s4, %s2
  $region1: #{tpu_custom_call.1} parent=0
    #allocation3 [shape = 'u8[8192]{0}', space=vmem, size = 0x2000, scoped, tag = 'input window, operand 0']
    #allocation4 [shape = 's32[2]{0}', space=sflag, size = 0x8, scoped, tag = 'scoped memory for tpu_custom_call.1']
    #allocation5 [shape = 's32[2]{0}', space=sflag, size = 0x8, scoped, tag = 'scoped memory for tpu_custom_call.1']
    #allocation6 [shape = 'u8[1024]{0}', space=vmem, size = 0x400, scoped, tag = 'output window, operand 0']
    %6 = vsyncpa [#allocation4], 0
    %s7 = scalar_lea.sflag [#allocation4], 1
    %8 = vsyncpa %s7, 0
    %9 = vsyncpa [#allocation5], 0
    %s10 = scalar_lea.sflag [#allocation5], 1
    %11 = vsyncpa %s10, 0
    loop: start=0, step=1, limit=4
    $region2: #{tpu_custom_call.1} parent=1 // loop_pre_header
      _
    $region3: #{tpu_custom_call.1} parent=1 // loop_header
      %s13 = sphi 0, %s17
      %p14 = scmp.ge.s32.totalorder %s13, 4
      %s20 = sphi 0, %s32
      %s21 = sphi 0, %s28
      %s22 = sphi 0, %s20
      %s23 = sphi 0, %s21
      %s24 = sphi 0, %s22
      %s25 = sphi 0, %s23
      %s37 = sphi 0, %s39
      %s40 = sphi 0, %s37
      %s41 = sphi 0, %s40
      %s57 = sphi 0, %s41
      %s63 = sphi 0, %s65
      %s66 = sphi 0, %s63
      %s67 = sphi 0, %s66
      %s83 = sphi 0, %s67
    $region4: #{tpu_custom_call.1} parent=1 // loop_header_branch
      %16 = sbr.rel (%p14) target = $region8
    $region5: #{tpu_custom_call.1} parent=1 // loop_body
      %s18 = ssub.s32 %s13, 1
      %s19 = ssub.s32 %s13, 2
      %s26 = sadd.s32 1, %s21
      %p27 = scmp.ge.s32.totalorder %s26, 1
      %s28 = scalar_select %p27, 0, %s26
      %s29 = sadd.s32 1, %s20
      %s30 = scalar_select %p27, %s29, %s20
      %p31 = scmp.ge.s32.totalorder %s30, 2
      %s32 = scalar_select %p31, 0, %s30
      %s33 = ssub.s32 %s20, %s32
      %s34 = ssub.s32 %s21, %s28
      %s35 = sor.u32 %s33, %s34
      %p36 = scmp.eq.s32.totalorder %s35, 0
      %s38 = sadd.s32 %s37, 1
      %s39 = scalar_select %p36, %s37, %s38
      %p42 = pneg %p36
      %p43 = scmp.eq.s32.totalorder %s13, 1
      %p44 = por %p42, %p43
      %p45 = scmp.ne.s32.totalorder %s37, %s40
      %p46 = scmp.eq.s32.totalorder %s13, 0
      %p47 = por %p45, %p46
      %p48 = scmp.ne.s32.totalorder %s37, %s40
      %p49 = scmp.eq.s32.totalorder %s18, 1
      %p50 = por %p48, %p49
      %p51 = scmp.ne.s32.totalorder %s40, %s41
      %p52 = scmp.eq.s32.totalorder %s18, 0
      %p53 = por %p51, %p52
      %p54 = scmp.ne.s32.totalorder %s40, %s41
      %p55 = scmp.eq.s32.totalorder %s19, 1
      %p56 = por %p54, %p55
      %p58 = scmp.ne.s32.totalorder %s41, %s57
      %p59 = scmp.eq.s32.totalorder %s19, 0
      %p60 = por %p58, %p59
      %s61 = ssub.s32 %s20, %s32
      %p62 = scmp.eq.s32.totalorder %s61, 0
      %s64 = sadd.s32 %s63, 1
      %s65 = scalar_select %p62, %s63, %s64
      %p68 = pneg %p62
      %p69 = scmp.eq.s32.totalorder %s13, 1
      %p70 = por %p68, %p69
      %p71 = scmp.ne.s32.totalorder %s63, %s66
      %p72 = scmp.eq.s32.totalorder %s13, 0
      %p73 = por %p71, %p72
      %p74 = scmp.ne.s32.totalorder %s63, %s66
      %p75 = scmp.eq.s32.totalorder %s18, 1
      %p76 = por %p74, %p75
      %p77 = scmp.ne.s32.totalorder %s66, %s67
      %p78 = scmp.eq.s32.totalorder %s18, 0
      %p79 = por %p77, %p78
      %p80 = scmp.ne.s32.totalorder %s66, %s67
      %p81 = scmp.eq.s32.totalorder %s19, 1
      %p82 = por %p80, %p81
      %p84 = scmp.ne.s32.totalorder %s67, %s83
      %p85 = scmp.eq.s32.totalorder %s19, 0
      %p86 = por %p84, %p85
      %p87 = scmp.le.s32.totalorder 1, %s13
      %p88 = scmp.lt.s32.totalorder %s13, 3
      %p89 = pnand %p87, %p88
      %p90 = pneg %p89
      // Predicated region
      $region9: #{tpu_custom_call.1} parent=5 // pred_check
        _
      $region10: #{tpu_custom_call.1} parent=5 // pred_check_branch
        %92 = sbr.rel (%p89) target = $region12
      $region11: #{tpu_custom_call.1} parent=5 // pred_region
        %s93 = ssub.s32 %s13, 1
      $region12: #{tpu_custom_call.1} parent=5 // pred_fallthru
        _
      %p94 = scmp.lt.s32.totalorder %s13, 2
      // Predicated region
      $region13: #{tpu_custom_call.1} parent=5 // pred_check
        %p95 = pneg %p94
      $region14: #{tpu_custom_call.1} parent=5 // pred_check_branch
        %97 = sbr.rel (%p95) target = $region16
      $region15: #{tpu_custom_call.1} parent=5 // pred_region
        // Predicated region
        $region17: #{tpu_custom_call.1} parent=15 // pred_check
          %p98 = pneg %p47
        $region18: #{tpu_custom_call.1} parent=15 // pred_check_branch
          %100 = sbr.rel (%p98) target = $region20
        $region19: #{tpu_custom_call.1} parent=15 // pred_region
          %s101 = sand.u32 %s37, 1
          %s102 = scalar_lea.sflag [#allocation4], %s101
          %s103 = sand.u32 %s37, 1
          %s104 = smul.addr %s103, 8
          %s105 = scalar_lea.vmem [#allocation3], %s104
          %s107 = ssub.s32 128, 128
          %108 = vsyncadd %s102, %s107
          %s109 = smul.addr %s20, 4
          %s110 = sadd.s32 %s21, %s109
          %s111 = smul.addr %s110, 32
          %s112 = scalar_lea.hbm %s0, %s111
          %s113 = sshll.u32 %s105, 4
          %s114 = int_to_ptr.vmem [resolvable:$true] %s113
          %119 = dma.hbm_to_vmem [thread:$0]  %s112, 128, %s114, %s102, 32, 32, 2
        $region20: #{tpu_custom_call.1} parent=15 // pred_fallthru
          _
      $region16: #{tpu_custom_call.1} parent=5 // pred_fallthru
        _
      %p120 = scmp.le.s32.totalorder 1, %s13
      %p121 = scmp.lt.s32.totalorder %s13, 3
      %p122 = pnand %p120, %p121
      %p123 = pneg %p122
      // Predicated region
      $region21: #{tpu_custom_call.1} parent=5 // pred_check
        _
      $region22: #{tpu_custom_call.1} parent=5 // pred_check_branch
        %125 = sbr.rel (%p122) target = $region24
      $region23: #{tpu_custom_call.1} parent=5 // pred_region
        %s126 = ssub.s32 %s13, 1
        %s127 = sand.u32 %s40, 1
        %s128 = scalar_lea.sflag [#allocation4], %s127
        %s129 = sand.u32 %s40, 1
        %s130 = smul.addr %s129, 8
        %s131 = scalar_lea.vmem [#allocation3], %s130
        // Predicated region
        $region25: #{tpu_custom_call.1} parent=23 // pred_check
          %p132 = pneg %p53
        $region26: #{tpu_custom_call.1} parent=23 // pred_check_branch
          %134 = sbr.rel (%p132) target = $region28
        $region27: #{tpu_custom_call.1} parent=23 // pred_region
          %135 = dma.done %s128, 128
        $region28: #{tpu_custom_call.1} parent=23 // pred_fallthru
          _
        %s136 = sand.u32 %s40, 1
        %s137 = scalar_lea.sflag [#allocation4], %s136
        %s138 = sand.u32 %s40, 1
        %s139 = smul.addr %s138, 8
        %s140 = scalar_lea.vmem [#allocation3], %s139
        %p141 = pneg %p53
        %p142 = pneg %p50
        %p143 = pneg %p79
        %p144 = pneg %p76
        %s145 = sand.u32 %s66, 1
        %s146 = scalar_lea.sflag [#allocation5], %s145
        %s147 = sand.u32 %s66, 1
        %s148 = scalar_lea.vmem [#allocation6], %s147
        %p149 = scmp.eq.s32.totalorder %s23, 0
        // Predicated region
        $region29: #{tpu_custom_call.1} parent=23 // pred_check
          %p150 = pneg %p149
        $region30: #{tpu_custom_call.1} parent=23 // pred_check_branch
          %152 = sbr.rel (%p150) target = $region32
        $region31: #{tpu_custom_call.1} parent=23 // pred_region
          %153 = vst [vmem:[#allocation2] sm:$0xff] 0.0
          %154 = vst [vmem:[#allocation2 + $0x8] sm:$0xff] 0.0
        $region32: #{tpu_custom_call.1} parent=23 // pred_fallthru
          _
        %v155 = vld [vmem:[%s131] sm:$0x3]
        %s156 = scalar_lea.vmem %s131, 2 [#allocation3]
        %v157 = vld [vmem:[%s156] sm:$0x3]
        %v158 = vmax.f32 %v155, %v157
        %s159 = scalar_lea.vmem %s131, 4 [#allocation3]
        %v160 = vld [vmem:[%s159] sm:$0x3]
        %v161 = vmax.f32 %v158, %v160
        %s162 = scalar_lea.vmem %s131, 6 [#allocation3]
        %v163 = vld [vmem:[%s162] sm:$0x3]
        %v164 = vmax.f32 %v161, %v163
        %v165 = vsub.f32 %v155, %v164
        %v166 = vmul.f32 %v165, 1.442695
        %v167 = vpow.pop %v166
        %v168 = vsub.f32 %v157, %v164
        %v169 = vmul.f32 %v168, 1.442695
        %v170 = vpow.pop %v169
        %v171 = vadd.f32 %v167, %v170
        %v172 = vsub.f32 %v160, %v164
        %v173 = vmul.f32 %v172, 1.442695
        %v174 = vpow.pop %v173
        %v175 = vadd.f32 %v171, %v174
        %v176 = vsub.f32 %v163, %v164
        %v177 = vmul.f32 %v176, 1.442695
        %v178 = vpow.pop %v177
        %v179 = vadd.f32 %v175, %v178
        %v180 = vlog2.pop %v179
        %v181 = vmul.f32 %v180, 0.6931472
        %v182 = vmul.f32 %v179, 1e-10
        %v183 = vadd.f32 %v175, %v182
        %v184 = vlog2.pop %v183
        %v185 = vmul.f32 %v184, 0.6931472
        %v186 = vsub.f32 %v181, %v185
        %v187 = vld [vmem:[#allocation2] sm:$0x3]
        %v188 = vadd.f32 %v187, %v186
        %189 = vst [vmem:[#allocation2] sm:$0x3] %v188
        // Predicated region
        $region33: #{tpu_custom_call.1} parent=23 // pred_check
          %p190 = pneg %p149
        $region34: #{tpu_custom_call.1} parent=23 // pred_check_branch
          %192 = sbr.rel (%p190) target = $region36
        $region35: #{tpu_custom_call.1} parent=23 // pred_region
          %v193 = vld [vmem:[#allocation2] sm:$0xff]
          %v194 = vld [vmem:[#allocation2 + $0x8] sm:$0xff]
          %v195 = vadd.f32 %v193, %v194
          %v196 = vrot.slane %v195, 4
          %v197 = vadd.f32 %v195, %v196
          %v198 = vrot.slane %v197, 2
          %v199 = vadd.f32 %v197, %v198
          %v200 = vrot.slane %v199, 1
          %v201 = vadd.f32 %v199, %v200
          %202 = vst [vmem:[%s148] sm:$0x1] %v201
        $region36: #{tpu_custom_call.1} parent=23 // pred_fallthru
          _
        %s203 = sand.u32 %s66, 1
        %s204 = scalar_lea.sflag [#allocation5], %s203
        %s205 = sand.u32 %s66, 1
        %s206 = scalar_lea.vmem [#allocation6], %s205
        // Predicated region
        $region37: #{tpu_custom_call.1} parent=23 // pred_check
          %p207 = pneg %p76
        $region38: #{tpu_custom_call.1} parent=23 // pred_check_branch
          %209 = sbr.rel (%p207) target = $region40
        $region39: #{tpu_custom_call.1} parent=23 // pred_region
          %s211 = ssub.s32 16, 16
          %212 = vsyncadd %s204, %s211
          %s213 = smul.addr %s22, 16
          %s214 = scalar_lea.hbm %s1, %s213
          %s216 = sshll.u32 %s206, 4
          %s217 = int_to_ptr.vmem [resolvable:$true] %s216
          %219 = dma.vmem_to_hbm [thread:$0]  %s217, 16, %s214, %s204
        $region40: #{tpu_custom_call.1} parent=23 // pred_fallthru
          _
      $region24: #{tpu_custom_call.1} parent=5 // pred_fallthru
        _
      %p220 = scmp.le.s32.totalorder 2, %s13
      // Predicated region
      $region41: #{tpu_custom_call.1} parent=5 // pred_check
        %p221 = pneg %p220
      $region42: #{tpu_custom_call.1} parent=5 // pred_check_branch
        %223 = sbr.rel (%p221) target = $region44
      $region43: #{tpu_custom_call.1} parent=5 // pred_region
        %s224 = ssub.s32 %s13, 2
        // Predicated region
        $region45: #{tpu_custom_call.1} parent=43 // pred_check
          %p225 = pneg %p82
        $region46: #{tpu_custom_call.1} parent=43 // pred_check_branch
          %227 = sbr.rel (%p225) target = $region48
        $region47: #{tpu_custom_call.1} parent=43 // pred_region
          %s228 = sand.u32 %s67, 1
          %s229 = scalar_lea.sflag [#allocation5], %s228
          %s230 = sand.u32 %s67, 1
          %s231 = scalar_lea.vmem [#allocation6], %s230
          %232 = dma.done %s229, 16
        $region48: #{tpu_custom_call.1} parent=43 // pred_fallthru
          _
      $region44: #{tpu_custom_call.1} parent=5 // pred_fallthru
        _
    $region6: #{tpu_custom_call.1} parent=1 // loop_footer
      %s17 = sadd.s32 1, %s13
    $region7: #{tpu_custom_call.1} parent=1 // loop_footer_branch
      %12 = sbr.rel target = $region3
    $region8: #{tpu_custom_call.1} parent=1 // loop_exit
      _
    %233 = vsyncpa [#allocation4], 1
    %s234 = scalar_lea.sflag [#allocation4], 1
    %235 = vsyncpa %s234, 1
    %236 = vsyncpa [#allocation5], 1
    %s237 = scalar_lea.sflag [#allocation5], 1
    %238 = vsyncpa %s237, 1

</llo_original>
